<compile_context>
chip_gen: v7x
topology: tpu7x:2x2x1
jax: 0.10.0
libtpu: 0.0.40
codegen_flags: <defaults>
</compile_context>

<pallas_src>
import functools

import jax
import jax.numpy as jnp
from jax.experimental import pallas as pl
from jax.experimental.pallas import tpu as pltpu


def _kernel_slices(h, x1_ref, x2_ref, o_ref):
    # h % 128 == 0: every segment store is lane-aligned / unmasked; avoids the
    # (tr, 4h) concat temporary entirely.
    a = x1_ref[...]
    b = x2_ref[...]
    o_ref[:, 0 * h:1 * h] = a
    o_ref[:, 1 * h:2 * h] = b
    o_ref[:, 2 * h:3 * h] = a * b
    o_ref[:, 3 * h:4 * h] = jnp.abs(a - b)


def _kernel_concat(x1_ref, x2_ref, o_ref):
    # Ragged H: one full-width, lane-dense store instead of four masked/strided
    # partial stores.
    a = x1_ref[...]
    b = x2_ref[...]
    o_ref[...] = jnp.concatenate((a, b, a * b, jnp.abs(a - b)), axis=-1)


def _chip_info():
    vmem_cap = 64 * 1024 * 1024   # conservative (v7x-sized) fallback
    num_cores = 1
    try:
        info = pltpu.get_tpu_info()
        vmem_cap = int(getattr(info, "vmem_capacity_bytes", vmem_cap))
        for attr in ("num_cores", "tensorcores_per_chip", "num_tensorcores", "core_count"):
            val = getattr(info, attr, None)
            if val:
                num_cores = int(val)
                break
    except Exception:
        pass
    return vmem_cap, max(1, num_cores)


def _round_up(x, m):
    return -(-x // m) * m


def _pick_row_tile(rows, h, itemsize, vmem_cap, num_cores):
    lane = 128
    pack = max(8, 32 // itemsize)            # sublane packing for the dtype
    h_in = _round_up(h, lane)                # lane-padded input width in VMEM
    h_out = _round_up(4 * h, lane)           # lane-padded output width in VMEM
    ragged = (h % lane) != 0

    # Per-row pipeline footprint: 2 inputs + 1 output, each double-buffered,
    # plus the concat temporary on the ragged-H path.
    bytes_per_row = (2 * 2 * h_in + 2 * h_out + (h_out if ragged else 0)) * itemsize
    vmem_budget = vmem_cap // 2              # keep ample headroom under the limit
    tr_vmem = max(pack, (vmem_budget // bytes_per_row) // pack * pack)

    # Cap by per-step HBM traffic (~24 MiB combined in+out per step) rather
    # than a fixed row count.
    traffic_per_row = 6 * h * itemsize
    tr_traffic = max(pack, ((24 << 20) // traffic_per_row) // pack * pack)

    tr = min(tr_vmem, tr_traffic)

    # Never exceed the (pack-rounded) row count: tiny inputs get tiny tiles.
    rows_up = _round_up(max(rows, 1), pack)
    tr = min(tr, rows_up)

    # On multi-TensorCore chips (v7x) keep >= ~3 grid steps per core so each
    # core still overlaps fetch/compute/writeback after the megacore split.
    # (Single-TC chips skip this: the split would only add per-step overhead.)
    if num_cores > 1 and rows_up > num_cores * pack:
        min_steps = 3 * num_cores
        tr_split = _round_up(-(-rows_up // min_steps), pack)
        tr = min(tr, max(tr_split, pack))

    tr = max(tr, pack)
    return tr, tr * bytes_per_row


def linear_aggregation(input_1, input_2):
    assert input_1.shape == input_2.shape
    assert input_1.dtype == input_2.dtype
    h = input_1.shape[-1]
    lead_shape = input_1.shape[:-1]
    dtype = input_1.dtype
    itemsize = jnp.dtype(dtype).itemsize

    x1 = input_1.reshape(-1, h)
    x2 = input_2.reshape(-1, h)
    rows = x1.shape[0]

    if rows == 0 or h == 0:
        return jnp.zeros((*lead_shape, 4 * h), dtype=dtype)

    vmem_cap, num_cores = _chip_info()
    tr, footprint = _pick_row_tile(rows, h, itemsize, vmem_cap, num_cores)

    # Footprint-derived VMEM limit (headroom for compiler scratch), capped at
    # ~70% of physical VMEM.
    vmem_limit = int(min(max(footprint * 5 // 4 + (4 << 20), 32 << 20),
                         vmem_cap * 7 // 10))

    if h % 128 == 0:
        kernel = functools.partial(_kernel_slices, h)
    else:
        kernel = _kernel_concat

    # Ragged last row-block handled by Pallas: boundary input rows are padded
    # (never read into valid output) and out-of-bounds output rows are dropped.
    grid = (pl.cdiv(rows, tr),)
    # NOTE: for an extremely large H that can't fit even a pack-row tile in
    # VMEM, an additional 128-multiple H grid axis (output viewed as
    # (rows, 4, h)) would be needed; not required for realistic hidden sizes.

    out = pl.pallas_call(
        kernel,
        out_shape=jax.ShapeDtypeStruct((rows, 4 * h), dtype),
        grid_spec=pltpu.PrefetchScalarGridSpec(
            num_scalar_prefetch=0,
            grid=grid,
            in_specs=[
                pl.BlockSpec((tr, h), lambda i: (i, 0)),
                pl.BlockSpec((tr, h), lambda i: (i, 0)),
            ],
            out_specs=pl.BlockSpec((tr, 4 * h), lambda i: (i, 0)),
        ),
        compiler_params=pltpu.CompilerParams(
            dimension_semantics=("parallel",),
            vmem_limit_bytes=vmem_limit,
        ),
    )(x1, x2)

    return out.reshape(*lead_shape, 4 * h)


def _reference(input_1, input_2):
    mult = input_1 * input_2
    diff = jnp.abs(input_1 - input_2)
    return jnp.concatenate((input_1, input_2, mult, diff), axis=-1)


if __name__ == "__main__":
    key = jax.random.PRNGKey(0)
    k1, k2, k3, k4 = jax.random.split(key, 4)

    # Case 1: module-typical shape (batch=2, seq=8, hidden=32) -> concat path.
    batch, seq, hidden = 2, 8, 32
    x1 = jax.random.normal(k1, (batch, seq, hidden), dtype=jnp.float32)
    x2 = jax.random.normal(k2, (batch, seq, hidden), dtype=jnp.float32)
    y = linear_aggregation(x1, x2)
    jax.block_until_ready(y)
    assert y.shape == (batch, seq, 4 * hidden), y.shape
    assert jnp.allclose(y, _reference(x1, x2), atol=1e-6, rtol=1e-6)

    # Case 2: H % 128 == 0 with ragged row count -> slice-store path + boundary block.
    a1 = jax.random.normal(k3, (3, 5, 128), dtype=jnp.float32)
    a2 = jax.random.normal(k4, (3, 5, 128), dtype=jnp.float32)
    z = linear_aggregation(a1, a2)
    jax.block_until_ready(z)
    assert z.shape == (3, 5, 512), z.shape
    assert jnp.allclose(z, _reference(a1, a2), atol=1e-6, rtol=1e-6)

    print("KERNEL_OK")
</pallas_src>

<mosaic_0001>
module attributes {stable_mosaic.version = 11 : i64} {
  func.func @_kernel_concat(%arg0: i32, %arg1: memref<16x32xf32, #tpu.memory_space<vmem>>, %arg2: memref<16x32xf32, #tpu.memory_space<vmem>>, %arg3: memref<16x128xf32, #tpu.memory_space<vmem>>) attributes {dimension_semantics = [#tpu.dimension_semantics<parallel>], iteration_bounds = array<i64: 1>, scalar_prefetch = 0 : i64, scratch_operands = 0 : i64, tpu.core_type = #tpu.core_type<tc>, window_params = [{transform_indices = @transform_0, window_bounds = array<i64: 16, 32>}, {transform_indices = @transform_1, window_bounds = array<i64: 16, 32>}, {transform_indices = @transform_2, window_bounds = array<i64: 16, 128>}]} {
    %c0 = arith.constant 0 : index
    %c0_0 = arith.constant 0 : index
    %0 = vector.load %arg1[%c0, %c0_0] : memref<16x32xf32, #tpu.memory_space<vmem>>, vector<16x32xf32>
    %c0_1 = arith.constant 0 : index
    %c0_2 = arith.constant 0 : index
    %1 = vector.load %arg2[%c0_1, %c0_2] : memref<16x32xf32, #tpu.memory_space<vmem>>, vector<16x32xf32>
    %2 = arith.mulf %0, %1 : vector<16x32xf32>
    %3 = arith.subf %0, %1 : vector<16x32xf32>
    %4 = math.absf %3 : vector<16x32xf32>
    %5 = tpu.concatenate %0, %1, %2, %4 in 1 : vector<16x32xf32>, vector<16x32xf32>, vector<16x32xf32>, vector<16x32xf32> -> vector<16x128xf32>
    %c0_3 = arith.constant 0 : index
    %c0_4 = arith.constant 0 : index
    %6 = vector.load %arg3[%c0_3, %c0_4] : memref<16x128xf32, #tpu.memory_space<vmem>>, vector<16x128xf32>
    tpu.vector_store %arg3[%c0_3, %c0_4], %5 {strides = array<i32>} : memref<16x128xf32, #tpu.memory_space<vmem>>, vector<16x128xf32>,
    return
  }
  func.func @transform_0(%arg0: i32) -> (i32, i32) {
    %c0_i32 = arith.constant 0 : i32
    %c0_i32_0 = arith.constant 0 : i32
    return %arg0, %c0_i32 : i32, i32
  }
  func.func @transform_1(%arg0: i32) -> (i32, i32) {
    %c0_i32 = arith.constant 0 : i32
    %c0_i32_0 = arith.constant 0 : i32
    return %arg0, %c0_i32 : i32, i32
  }
  func.func @transform_2(%arg0: i32) -> (i32, i32) {
    %c0_i32 = arith.constant 0 : i32
    %c0_i32_0 = arith.constant 0 : i32
    return %arg0, %c0_i32 : i32, i32
  }
}

</mosaic_0001>

<llo_original>
// kernel: tpu_custom_call.1
$region0: #{tpu_custom_call.1}
  #allocation0 [shape = 'u32[]', space=smem, size = 0x4, offset = 0x4, fixed_abs, tag = 'smem constant byte address 0x4 - core index']
  #allocation1 [shape = 'u32[144,128]{1,0:T(1,128)}', space=vmem, size = 0x12000, scoped, tag = 'internal scratch']
  %s0 = inlined_call_operand.hbm [shape: f32[16,32], index: 0, kind: input, shape index: {}]
  %s1 = inlined_call_operand.hbm [shape: f32[16,32], index: 1, kind: input, shape index: {}]
  %s2 = inlined_call_operand.hbm [shape: f32[16,128], index: 2, kind: output, shape index: {}]
  %s3 = sld [smem:[#allocation0]]
  $region26: #{tpu_custom_call.1} parent=0
    _
  %s5 = ssub.s32 1, %s3
  %s6 = scalar_select 0, %s5, %s3
  $region1: #{tpu_custom_call.1} parent=0
    #allocation2 [shape = 'u8[8192]{0}', space=vmem, size = 0x2000, scoped, tag = 'input window, operand 0, single buffered']
    #allocation3 [shape = 's32[1]{0}', space=sflag, size = 0x4, scoped, tag = 'scoped memory for tpu_custom_call.1']
    #allocation4 [shape = 's32[1]{0}', space=sflag, size = 0x4, scoped, tag = 'scoped memory for tpu_custom_call.1']
    #allocation5 [shape = 'u8[8192]{0}', space=vmem, size = 0x2000, scoped, tag = 'input window, operand 1, single buffered']
    #allocation6 [shape = 's32[1]{0}', space=sflag, size = 0x4, scoped, tag = 'scoped memory for tpu_custom_call.1']
    #allocation7 [shape = 'u8[8192]{0}', space=vmem, size = 0x2000, scoped, tag = 'output window, operand 0, single buffered']
    %7 = vsyncpa [#allocation3], 0
    %8 = vsyncpa [#allocation6], 0
    %9 = vsyncpa [#allocation4], 0
    // Predicated region
    $region2: #{tpu_custom_call.1} parent=1 // pred_check
      _
    $region3: #{tpu_custom_call.1} parent=1 // pred_check_branch
      %11 = sbr.rel (0) target = $region5
    $region4: #{tpu_custom_call.1} parent=1 // pred_region
      %s13 = ssub.s32 256, 256
      %14 = vsyncadd [#allocation3], %s13
      %s15 = sshll.u32 [#allocation2], 4
      %s16 = int_to_ptr.vmem [resolvable:$true] %s15
      %21 = dma.hbm_to_vmem [thread:$0]  %s0, 256, %s16, [#allocation3], 128, 128, 8
    $region5: #{tpu_custom_call.1} parent=1 // pred_fallthru
      _
    // Predicated region
    $region6: #{tpu_custom_call.1} parent=1 // pred_check
      _
    $region7: #{tpu_custom_call.1} parent=1 // pred_check_branch
      %23 = sbr.rel (0) target = $region9
    $region8: #{tpu_custom_call.1} parent=1 // pred_region
      %s25 = ssub.s32 256, 256
      %26 = vsyncadd [#allocation6], %s25
      %s27 = sshll.u32 [#allocation5], 4
      %s28 = int_to_ptr.vmem [resolvable:$true] %s27
      %33 = dma.hbm_to_vmem [thread:$0]  %s1, 256, %s28, [#allocation6], 128, 128, 8
    $region9: #{tpu_custom_call.1} parent=1 // pred_fallthru
      _
    // Predicated region
    $region10: #{tpu_custom_call.1} parent=1 // pred_check
      _
    $region11: #{tpu_custom_call.1} parent=1 // pred_check_branch
      %35 = sbr.rel (0) target = $region13
    $region12: #{tpu_custom_call.1} parent=1 // pred_region
      %36 = dma.done [#allocation3], 256
    $region13: #{tpu_custom_call.1} parent=1 // pred_fallthru
      _
    // Predicated region
    $region14: #{tpu_custom_call.1} parent=1 // pred_check
      _
    $region15: #{tpu_custom_call.1} parent=1 // pred_check_branch
      %38 = sbr.rel (0) target = $region17
    $region16: #{tpu_custom_call.1} parent=1 // pred_region
      %39 = dma.done [#allocation6], 256
    $region17: #{tpu_custom_call.1} parent=1 // pred_fallthru
      _
    %v40 = vld [vmem:[#allocation2] sm:$0xff]
    %v41 = vld [vmem:[#allocation2 + $0x8] sm:$0xff]
    %v42 = vld [vmem:[#allocation5] sm:$0xff]
    %v43 = vld [vmem:[#allocation5 + $0x8] sm:$0xff]
    %v44 = vmul.f32 %v40, %v42
    %v45 = vmul.f32 %v41, %v43
    %v46 = vsub.f32 %v40, %v42
    %v47 = vsub.f32 %v41, %v43
    %v48 = vand.u32 2147483647, %v46
    %v49 = vand.u32 2147483647, %v47
    %52 = vrot.lane.b32.xlu0 %v42, 32
    %v53 = vpop.permute.xlu0 %52
    %54 = vrot.lane.b32.xlu0 %v43, 32
    %v55 = vpop.permute.xlu0 %54
    %60 = vrot.lane.b32.xlu0 %v44, 64
    %v61 = vpop.permute.xlu0 %60
    %62 = vrot.lane.b32.xlu0 %v45, 64
    %v63 = vpop.permute.xlu0 %62
    %68 = vrot.lane.b32.xlu0 %v48, 96
    %v69 = vpop.permute.xlu0 %68
    %70 = vrot.lane.b32.xlu0 %v49, 96
    %v71 = vpop.permute.xlu0 %70
    %vm74 = vcmask 261120
    %v75 = vsel %vm74, %v40, %v53
    %v76 = vsel %vm74, %v41, %v55
    %vm77 = vcmask 523264
    %v78 = vsel %vm77, %v75, %v61
    %v79 = vsel %vm77, %v76, %v63
    %vm80 = vcmask 785408
    %v81 = vsel %vm80, %v78, %v69
    %v82 = vsel %vm80, %v79, %v71
    %83 = vst [vmem:[#allocation7] sm:$0xff] %v81
    %84 = vst [vmem:[#allocation7 + $0x8] sm:$0xff] %v82
    // Predicated region
    $region18: #{tpu_custom_call.1} parent=1 // pred_check
      _
    $region19: #{tpu_custom_call.1} parent=1 // pred_check_branch
      %86 = sbr.rel (0) target = $region21
    $region20: #{tpu_custom_call.1} parent=1 // pred_region
      %s88 = ssub.s32 256, 256
      %89 = vsyncadd [#allocation4], %s88
      %s90 = sshll.u32 [#allocation7], 4
      %s91 = int_to_ptr.vmem [resolvable:$true] %s90
      %96 = dma.vmem_to_hbm [thread:$0]  %s91, 256, %s2, [#allocation4], 128, 128, 8
    $region21: #{tpu_custom_call.1} parent=1 // pred_fallthru
      _
    // Predicated region
    $region22: #{tpu_custom_call.1} parent=1 // pred_check
      _
    $region23: #{tpu_custom_call.1} parent=1 // pred_check_branch
      %98 = sbr.rel (0) target = $region25
    $region24: #{tpu_custom_call.1} parent=1 // pred_region
      %99 = dma.done [#allocation4], 256
    $region25: #{tpu_custom_call.1} parent=1 // pred_fallthru
      _
    %100 = vsyncpa [#allocation3], 1
    %101 = vsyncpa [#allocation6], 1
    %102 = vsyncpa [#allocation4], 1

</llo_original>
